<compile_context>
chip_gen: v7x
topology: tpu7x:2x2x1
jax: 0.10.0
libtpu: 0.0.40
codegen_flags: <defaults>
</compile_context>

<pallas_src>
import functools

import jax
import jax.numpy as jnp
from jax.experimental import pallas as pl
from jax.experimental.pallas import tpu as pltpu

N = 4
T = 10
d = 4
INPUT_SIZE = N * T * d + N      # 164, matches the PyTorch module
H1 = 64
H2 = 32
OUT = N


def _mlp_kernel(x_ref, w1_ref, b1_ref, w2_ref, b2_ref, w3_ref, b3_ref, o_ref):
    # fc1 + ReLU: f32 MXU contraction over the (unpadded) 164-wide K dim.
    h1 = jnp.dot(x_ref[...], w1_ref[...], preferred_element_type=jnp.float32)
    h1 = jnp.maximum(h1 + b1_ref[...], 0.0)
    # fc2 + ReLU (tiny matmul; w2 is VMEM-resident).
    h2 = jnp.dot(h1, w2_ref[...], preferred_element_type=jnp.float32)
    h2 = jnp.maximum(h2 + b2_ref[...], 0.0)
    # fc3 + exact sigmoid (exp on the EUP; compute is fully hidden by the x DMA).
    z = jnp.dot(h2, w3_ref[...], preferred_element_type=jnp.float32) + b3_ref[...]
    o_ref[...] = 1.0 / (1.0 + jnp.exp(-z))


@functools.partial(jax.jit, static_argnames=("tb",))
def mask_predictor_forward(x, params, *, tb=2048):
    """x: (B, INPUT_SIZE) float32 -> (B, N) float32."""
    w1, b1, w2, b2, w3, b3 = params          # w1: (164, 64) f32, biases (1, H) f32
    B = x.shape[0]

    # Batch tile: if the whole batch fits in one tile, use TB == B (block dim
    # equal to the full array dim is always legal).  Otherwise use tb (a
    # multiple of 8 sublanes) and let Pallas mask the ragged last tile.
    if B <= tb:
        TB = B
    else:
        assert tb % 8 == 0, "tb must be a multiple of 8 sublanes"
        TB = tb
    grid = (pl.cdiv(B, TB),)

    flops = 2 * B * (INPUT_SIZE * H1 + H1 * H2 + H2 * OUT)
    bytes_accessed = 4 * (B * INPUT_SIZE + B * OUT
                          + INPUT_SIZE * H1 + H1 + H1 * H2 + H2 + H2 * OUT + OUT)

    return pl.pallas_call(
        _mlp_kernel,
        out_shape=jax.ShapeDtypeStruct((B, OUT), jnp.float32),
        grid=grid,
        in_specs=[
            pl.BlockSpec((TB, INPUT_SIZE), lambda i: (i, 0)),   # streamed x tile
            pl.BlockSpec((INPUT_SIZE, H1), lambda i: (0, 0)),   # weights/biases stay
            pl.BlockSpec((1, H1), lambda i: (0, 0)),            #   VMEM-resident
            pl.BlockSpec((H1, H2), lambda i: (0, 0)),           #   across the grid
            pl.BlockSpec((1, H2), lambda i: (0, 0)),
            pl.BlockSpec((H2, OUT), lambda i: (0, 0)),
            pl.BlockSpec((1, OUT), lambda i: (0, 0)),
        ],
        out_specs=pl.BlockSpec((TB, OUT), lambda i: (i, 0)),
        compiler_params=pltpu.CompilerParams(
            dimension_semantics=("parallel",)),                 # v7x megacore
        cost_estimate=pl.CostEstimate(
            flops=flops, transcendentals=B * OUT, bytes_accessed=bytes_accessed),
    )(x, w1, b1, w2, b2, w3, b3)


def init_params(key):
    """Deterministic PyTorch-style (Kaiming-uniform-ish) init, f32, (in, out) layout."""
    k1, k2, k3, k4, k5, k6 = jax.random.split(key, 6)

    def lin(kw, kb, fan_in, fan_out):
        bound = 1.0 / jnp.sqrt(fan_in)
        w = jax.random.uniform(kw, (fan_in, fan_out), jnp.float32, -bound, bound)
        b = jax.random.uniform(kb, (1, fan_out), jnp.float32, -bound, bound)
        return w, b

    w1, b1 = lin(k1, k2, INPUT_SIZE, H1)
    w2, b2 = lin(k3, k4, H1, H2)
    w3, b3 = lin(k5, k6, H2, OUT)
    return (w1, b1, w2, b2, w3, b3)


def _reference(x, params):
    """Pure-JAX reference (same math as the PyTorch module's forward)."""
    w1, b1, w2, b2, w3, b3 = params
    h = jnp.maximum(x @ w1 + b1, 0.0)
    h = jnp.maximum(h @ w2 + b2, 0.0)
    return jax.nn.sigmoid(h @ w3 + b3)


if __name__ == "__main__":
    key = jax.random.PRNGKey(0)
    kx, kp = jax.random.split(key)
    params = init_params(kp)

    # Small batch: single grid step, TB == B.
    B = 8
    x = jax.random.normal(kx, (B, INPUT_SIZE), jnp.float32)
    out = jax.block_until_ready(mask_predictor_forward(x, params))
    ref = _reference(x, params)
    assert out.shape == (B, OUT)
    assert jnp.allclose(out, ref, atol=2e-3, rtol=2e-3), float(jnp.abs(out - ref).max())

    # Larger batch exercising the multi-step pipeline and a ragged (masked) tail tile.
    B2 = 200
    x2 = jax.random.normal(kx, (B2, INPUT_SIZE), jnp.float32)
    out2 = jax.block_until_ready(mask_predictor_forward(x2, params, tb=64))
    ref2 = _reference(x2, params)
    assert out2.shape == (B2, OUT)
    assert jnp.allclose(out2, ref2, atol=2e-3, rtol=2e-3), float(jnp.abs(out2 - ref2).max())

    print("KERNEL_OK")
</pallas_src>

<mosaic_0001>
module attributes {stable_mosaic.version = 11 : i64} {
  func.func @_mlp_kernel(%arg0: i32, %arg1: memref<8x164xf32, #tpu.memory_space<vmem>>, %arg2: memref<164x64xf32, #tpu.memory_space<vmem>>, %arg3: memref<1x64xf32, #tpu.memory_space<vmem>>, %arg4: memref<64x32xf32, #tpu.memory_space<vmem>>, %arg5: memref<1x32xf32, #tpu.memory_space<vmem>>, %arg6: memref<32x4xf32, #tpu.memory_space<vmem>>, %arg7: memref<1x4xf32, #tpu.memory_space<vmem>>, %arg8: memref<8x4xf32, #tpu.memory_space<vmem>>) attributes {dimension_semantics = [#tpu.dimension_semantics<parallel>], iteration_bounds = array<i64: 1>, scalar_prefetch = 0 : i64, scratch_operands = 0 : i64, tpu.core_type = #tpu.core_type<tc>, window_params = [{transform_indices = @transform_0, window_bounds = array<i64: 8, 164>}, {pipeline_mode = #tpu.pipeline_mode<synchronous>, transform_indices = @transform_1, window_bounds = array<i64: 164, 64>}, {pipeline_mode = #tpu.pipeline_mode<synchronous>, transform_indices = @transform_2, window_bounds = array<i64: 1, 64>}, {pipeline_mode = #tpu.pipeline_mode<synchronous>, transform_indices = @transform_3, window_bounds = array<i64: 64, 32>}, {pipeline_mode = #tpu.pipeline_mode<synchronous>, transform_indices = @transform_4, window_bounds = array<i64: 1, 32>}, {pipeline_mode = #tpu.pipeline_mode<synchronous>, transform_indices = @transform_5, window_bounds = array<i64: 32, 4>}, {pipeline_mode = #tpu.pipeline_mode<synchronous>, transform_indices = @transform_6, window_bounds = array<i64: 1, 4>}, {transform_indices = @transform_7, window_bounds = array<i64: 8, 4>}]} {
    %c0 = arith.constant 0 : index
    %c0_0 = arith.constant 0 : index
    %0 = vector.load %arg1[%c0, %c0_0] : memref<8x164xf32, #tpu.memory_space<vmem>>, vector<8x164xf32>
    %c0_1 = arith.constant 0 : index
    %c0_2 = arith.constant 0 : index
    %1 = vector.load %arg2[%c0_1, %c0_2] : memref<164x64xf32, #tpu.memory_space<vmem>>, vector<164x64xf32>
    %cst = arith.constant dense<0.000000e+00> : vector<8x64xf32>
    %2 = tpu.matmul %0, %1, %cst {dimension_numbers = #tpu.dot_dimension_numbers<[1], [0], [0], [1], [0, 0, 1, 1], [], []>} : vector<8x164xf32>, vector<164x64xf32>, vector<8x64xf32> -> vector<8x64xf32>
    %c0_3 = arith.constant 0 : index
    %c0_4 = arith.constant 0 : index
    %3 = vector.load %arg3[%c0_3, %c0_4] : memref<1x64xf32, #tpu.memory_space<vmem>>, vector<1x64xf32>
    %4 = vector.broadcast %3 : vector<1x64xf32> to vector<8x64xf32>
    %5 = arith.addf %2, %4 : vector<8x64xf32>
    %cst_5 = arith.constant 0.000000e+00 : f32
    %6 = vector.broadcast %cst_5 : f32 to vector<8x64xf32>
    %7 = arith.maximumf %5, %6 : vector<8x64xf32>
    %c0_6 = arith.constant 0 : index
    %c0_7 = arith.constant 0 : index
    %8 = vector.load %arg4[%c0_6, %c0_7] : memref<64x32xf32, #tpu.memory_space<vmem>>, vector<64x32xf32>
    %cst_8 = arith.constant dense<0.000000e+00> : vector<8x32xf32>
    %9 = tpu.matmul %7, %8, %cst_8 {dimension_numbers = #tpu.dot_dimension_numbers<[1], [0], [0], [1], [0, 0, 1, 1], [], []>} : vector<8x64xf32>, vector<64x32xf32>, vector<8x32xf32> -> vector<8x32xf32>
    %c0_9 = arith.constant 0 : index
    %c0_10 = arith.constant 0 : index
    %10 = vector.load %arg5[%c0_9, %c0_10] : memref<1x32xf32, #tpu.memory_space<vmem>>, vector<1x32xf32>
    %11 = vector.broadcast %10 : vector<1x32xf32> to vector<8x32xf32>
    %12 = arith.addf %9, %11 : vector<8x32xf32>
    %cst_11 = arith.constant 0.000000e+00 : f32
    %13 = vector.broadcast %cst_11 : f32 to vector<8x32xf32>
    %14 = arith.maximumf %12, %13 : vector<8x32xf32>
    %c0_12 = arith.constant 0 : index
    %c0_13 = arith.constant 0 : index
    %15 = vector.load %arg6[%c0_12, %c0_13] : memref<32x4xf32, #tpu.memory_space<vmem>>, vector<32x4xf32>
    %cst_14 = arith.constant dense<0.000000e+00> : vector<8x4xf32>
    %16 = tpu.matmul %14, %15, %cst_14 {dimension_numbers = #tpu.dot_dimension_numbers<[1], [0], [0], [1], [0, 0, 1, 1], [], []>} : vector<8x32xf32>, vector<32x4xf32>, vector<8x4xf32> -> vector<8x4xf32>
    %c0_15 = arith.constant 0 : index
    %c0_16 = arith.constant 0 : index
    %17 = vector.load %arg7[%c0_15, %c0_16] : memref<1x4xf32, #tpu.memory_space<vmem>>, vector<1x4xf32>
    %18 = vector.broadcast %17 : vector<1x4xf32> to vector<8x4xf32>
    %19 = arith.addf %16, %18 : vector<8x4xf32>
    %cst_17 = arith.constant 0.000000e+00 : f32
    %20 = vector.broadcast %cst_17 : f32 to vector<8x4xf32>
    %21 = arith.subf %20, %19 : vector<8x4xf32>
    %22 = math.exp %21 : vector<8x4xf32>
    %cst_18 = arith.constant 1.000000e+00 : f32
    %23 = vector.broadcast %cst_18 : f32 to vector<8x4xf32>
    %24 = arith.addf %23, %22 : vector<8x4xf32>
    %cst_19 = arith.constant 1.000000e+00 : f32
    %25 = vector.broadcast %cst_19 : f32 to vector<8x4xf32>
    %26 = arith.divf %25, %24 : vector<8x4xf32>
    %c0_20 = arith.constant 0 : index
    %c0_21 = arith.constant 0 : index
    %27 = vector.load %arg8[%c0_20, %c0_21] : memref<8x4xf32, #tpu.memory_space<vmem>>, vector<8x4xf32>
    tpu.vector_store %arg8[%c0_20, %c0_21], %26 {strides = array<i32>} : memref<8x4xf32, #tpu.memory_space<vmem>>, vector<8x4xf32>,
    return
  }
  func.func @transform_0(%arg0: i32) -> (i32, i32) {
    %c0_i32 = arith.constant 0 : i32
    %c0_i32_0 = arith.constant 0 : i32
    return %arg0, %c0_i32 : i32, i32
  }
  func.func @transform_1(%arg0: i32) -> (i32, i32) {
    %c0_i32 = arith.constant 0 : i32
    %c0_i32_0 = arith.constant 0 : i32
    %c0_i32_1 = arith.constant 0 : i32
    return %c0_i32, %c0_i32_0 : i32, i32
  }
  func.func @transform_2(%arg0: i32) -> (i32, i32) {
    %c0_i32 = arith.constant 0 : i32
    %c0_i32_0 = arith.constant 0 : i32
    %c0_i32_1 = arith.constant 0 : i32
    return %c0_i32, %c0_i32_0 : i32, i32
  }
  func.func @transform_3(%arg0: i32) -> (i32, i32) {
    %c0_i32 = arith.constant 0 : i32
    %c0_i32_0 = arith.constant 0 : i32
    %c0_i32_1 = arith.constant 0 : i32
    return %c0_i32, %c0_i32_0 : i32, i32
  }
  func.func @transform_4(%arg0: i32) -> (i32, i32) {
    %c0_i32 = arith.constant 0 : i32
    %c0_i32_0 = arith.constant 0 : i32
    %c0_i32_1 = arith.constant 0 : i32
    return %c0_i32, %c0_i32_0 : i32, i32
  }
  func.func @transform_5(%arg0: i32) -> (i32, i32) {
    %c0_i32 = arith.constant 0 : i32
    %c0_i32_0 = arith.constant 0 : i32
    %c0_i32_1 = arith.constant 0 : i32
    return %c0_i32, %c0_i32_0 : i32, i32
  }
  func.func @transform_6(%arg0: i32) -> (i32, i32) {
    %c0_i32 = arith.constant 0 : i32
    %c0_i32_0 = arith.constant 0 : i32
    %c0_i32_1 = arith.constant 0 : i32
    return %c0_i32, %c0_i32_0 : i32, i32
  }
  func.func @transform_7(%arg0: i32) -> (i32, i32) {
    %c0_i32 = arith.constant 0 : i32
    %c0_i32_0 = arith.constant 0 : i32
    return %arg0, %c0_i32 : i32, i32
  }
}

</mosaic_0001>

<llo_original>
// kernel: mask_predictor_forward.1
$region0: #{mask_predictor_forward.1}
  #allocation0 [shape = 'u32[]', space=smem, size = 0x4, offset = 0x4, fixed_abs, tag = 'smem constant byte address 0x4 - core index']
  #allocation1 [shape = 'u32[144,128]{1,0:T(1,128)}', space=vmem, size = 0x12000, scoped, tag = 'internal scratch']
  %s0 = inlined_call_operand.vmem [shape: f32[8,164], index: 0, kind: input, shape index: {}]
  %s1 = inlined_call_operand.vmem [shape: f32[164,64], index: 1, kind: input, shape index: {}]
  %s2 = inlined_call_operand.vmem [shape: f32[1,64], index: 2, kind: input, shape index: {}]
  %s3 = inlined_call_operand.vmem [shape: f32[64,32], index: 3, kind: input, shape index: {}]
  %s4 = inlined_call_operand.vmem [shape: f32[1,32], index: 4, kind: input, shape index: {}]
  %s5 = inlined_call_operand.vmem [shape: f32[32,4], index: 5, kind: input, shape index: {}]
  %s6 = inlined_call_operand.vmem [shape: f32[1,4], index: 6, kind: input, shape index: {}]
  %s7 = inlined_call_operand.vmem [shape: f32[8,4], index: 7, kind: output, shape index: {}]
  %s8 = sld [smem:[#allocation0]]
  $region38: #{mask_predictor_forward.1} parent=0
    _
  %s10 = ssub.s32 1, %s8
  %s11 = scalar_select 0, %s10, %s8
  // Predicated region
  $region2: #{mask_predictor_forward.1} parent=0 // pred_check
    _
  $region3: #{mask_predictor_forward.1} parent=0 // pred_check_branch
    %13 = sbr.rel (0) target = $region5
  $region4: #{mask_predictor_forward.1} parent=0 // pred_region
    _
  $region5: #{mask_predictor_forward.1} parent=0 // pred_fallthru
    _
  // Predicated region
  $region6: #{mask_predictor_forward.1} parent=0 // pred_check
    _
  $region7: #{mask_predictor_forward.1} parent=0 // pred_check_branch
    %15 = sbr.rel (0) target = $region9
  $region8: #{mask_predictor_forward.1} parent=0 // pred_region
    _
  $region9: #{mask_predictor_forward.1} parent=0 // pred_fallthru
    _
  // Predicated region
  $region10: #{mask_predictor_forward.1} parent=0 // pred_check
    _
  $region11: #{mask_predictor_forward.1} parent=0 // pred_check_branch
    %17 = sbr.rel (0) target = $region13
  $region12: #{mask_predictor_forward.1} parent=0 // pred_region
    _
  $region13: #{mask_predictor_forward.1} parent=0 // pred_fallthru
    _
  // Predicated region
  $region14: #{mask_predictor_forward.1} parent=0 // pred_check
    _
  $region15: #{mask_predictor_forward.1} parent=0 // pred_check_branch
    %19 = sbr.rel (0) target = $region17
  $region16: #{mask_predictor_forward.1} parent=0 // pred_region
    _
  $region17: #{mask_predictor_forward.1} parent=0 // pred_fallthru
    _
  // Predicated region
  $region18: #{mask_predictor_forward.1} parent=0 // pred_check
    _
  $region19: #{mask_predictor_forward.1} parent=0 // pred_check_branch
    %21 = sbr.rel (0) target = $region21
  $region20: #{mask_predictor_forward.1} parent=0 // pred_region
    _
  $region21: #{mask_predictor_forward.1} parent=0 // pred_fallthru
    _
  // Predicated region
  $region22: #{mask_predictor_forward.1} parent=0 // pred_check
    _
  $region23: #{mask_predictor_forward.1} parent=0 // pred_check_branch
    %23 = sbr.rel (0) target = $region25
  $region24: #{mask_predictor_forward.1} parent=0 // pred_region
    _
  $region25: #{mask_predictor_forward.1} parent=0 // pred_fallthru
    _
  // Predicated region
  $region26: #{mask_predictor_forward.1} parent=0 // pred_check
    _
  $region27: #{mask_predictor_forward.1} parent=0 // pred_check_branch
    %25 = sbr.rel (0) target = $region29
  $region28: #{mask_predictor_forward.1} parent=0 // pred_region
    _
  $region29: #{mask_predictor_forward.1} parent=0 // pred_fallthru
    _
  %v26 = vld [vmem:[%s0] sm:$0xff]
  %v27 = vld [vmem:[%s0 + $0x8] sm:$0xff]
  %v28 = vld [vmem:[%s1] sm:$0xff]
  %v29 = vld [vmem:[%s1 + $0x8] sm:$0xff]
  %v30 = vld [vmem:[%s1 + $0x10] sm:$0xff]
  %v31 = vld [vmem:[%s1 + $0x18] sm:$0xff]
  %v32 = vld [vmem:[%s1 + $0x20] sm:$0xff]
  %v33 = vld [vmem:[%s1 + $0x28] sm:$0xff]
  %v34 = vld [vmem:[%s1 + $0x30] sm:$0xff]
  %v35 = vld [vmem:[%s1 + $0x38] sm:$0xff]
  %v36 = vld [vmem:[%s1 + $0x40] sm:$0xff]
  %v37 = vld [vmem:[%s1 + $0x48] sm:$0xff]
  %v38 = vld [vmem:[%s1 + $0x50] sm:$0xff]
  %v39 = vld [vmem:[%s1 + $0x58] sm:$0xff]
  %v40 = vld [vmem:[%s1 + $0x60] sm:$0xff]
  %v41 = vld [vmem:[%s1 + $0x68] sm:$0xff]
  %v42 = vld [vmem:[%s1 + $0x70] sm:$0xff]
  %v43 = vld [vmem:[%s1 + $0x78] sm:$0xff]
  %v44 = vld [vmem:[%s1 + $0x80] sm:$0xff]
  %v45 = vld [vmem:[%s1 + $0x88] sm:$0xff]
  %v46 = vld [vmem:[%s1 + $0x90] sm:$0xff]
  %v47 = vld [vmem:[%s1 + $0x98] sm:$0xff]
  %v48 = vld [vmem:[%s1 + $0xa0] sm:$0xf]
  %v49 = vld [vmem:[%s2] sm:$0x1]
  %v51 = vlaneseq
  %v52 = vshrl.u32 %v51, 7
  %v53 = vsub.s32 0, %v52
  %v54 = vrot.slane %v49, %v53
  %vm56 = vcmask 293888
  %v58 = vsel %vm56, %v27, 0
  %vm60 = vcmask 1043456
  %v62 = vsel %vm60, %v48, 0
  %64 = vmatprep.subr.mxu0 0.0
  %65 = vmatpush1.msra.mxu0 %v28
  %66 = vmatprep.subr.mxu0 0.0
  %67 = vmatpush1.msra.mxu0 %v29
  %68 = vmatprep.subr.mxu0 0.0
  %69 = vmatpush1.msra.mxu0 %v30
  %70 = vmatprep.subr.mxu0 0.0
  %71 = vmatpush1.msra.mxu0 %v31
  %72 = vmatprep.subr.mxu0 0.0
  %73 = vmatpush1.msra.mxu0 %v32
  %74 = vmatprep.subr.mxu0 0.0
  %75 = vmatpush1.msra.mxu0 %v33
  %76 = vmatprep.subr.mxu0 0.0
  %77 = vmatpush1.msra.mxu0 %v34
  %78 = vmatprep.subr.mxu0 0.0
  %79 = vmatpush1.msra.mxu0 %v35
  %80 = vmatprep.subr.mxu0 0.0
  %81 = vmatpush1.msra.mxu0 %v36
  %82 = vmatprep.subr.mxu0 0.0
  %83 = vmatpush1.msra.mxu0 %v37
  %84 = vmatprep.subr.mxu0 0.0
  %85 = vmatpush1.msra.mxu0 %v38
  %86 = vmatprep.subr.mxu0 0.0
  %87 = vmatpush1.msra.mxu0 %v39
  %88 = vmatprep.subr.mxu0 0.0
  %89 = vmatpush1.msra.mxu0 %v40
  %90 = vmatprep.subr.mxu0 0.0
  %91 = vmatpush1.msra.mxu0 %v41
  %92 = vmatprep.subr.mxu0 0.0
  %93 = vmatpush1.msra.mxu0 %v42
  %94 = vmatprep.subr.mxu0 0.0
  %95 = vmatpush1.msra.mxu0 %v43
  %96 = vmatprep.subr.mxu0 0.0
  %97 = vmatpush1.msra.mxu0 %v44
  %98 = vmatprep.subr.mxu0 0.0
  %99 = vmatpush1.msra.mxu0 %v45
  %100 = vmatprep.subr.mxu0 0.0
  %101 = vmatpush1.msra.mxu0 %v46
  %102 = vmatprep.subr.mxu0 0.0
  %103 = vmatpush1.msra.mxu0 %v47
  %104 = vmatprep.subr.mxu0 0.0
  %105 = vmatpush1.msra.mxu0 %v62
  %106 = vmatprep.subr.mxu0 0.0
  %107 = vmatpush1.msra.mxu0 0.0
  %108 = vmatprep.subr.mxu0 0.0
  %109 = vmatpush1.msra.mxu0 0.0
  %110 = vmatprep.subr.mxu0 0.0
  %111 = vmatpush1.msra.mxu0 0.0
  %112 = vmatprep.subr.mxu0 0.0
  %113 = vmatpush1.msra.mxu0 0.0
  %114 = vmatprep.subr.mxu0 0.0
  %115 = vmatpush1.msra.mxu0 0.0
  %116 = vmatprep.subr.mxu0 0.0
  %117 = vmatpush1.msra.mxu0 0.0
  %118 = vmatprep.subr.mxu0 0.0
  %119 = vmatpush1.msra.mxu0 0.0
  %120 = vmatprep.subr.mxu0 0.0
  %121 = vmatpush1.msra.mxu0 0.0
  %122 = vmatprep.subr.mxu0 0.0
  %123 = vmatpush1.msra.mxu0 0.0
  %124 = vmatprep.subr.mxu0 0.0
  %125 = vmatpush1.msra.mxu0 0.0
  %126 = vmatprep.subr.mxu0 0.0
  %127 = vmatpush1.msra.mxu0 0.0
  %128 = vmatprep.mubr.f32.mxu0 %v58
  %129 = vmatmul.mubr.f32.gmra.mrb[0].mxu0 %v26
  %v130 = vpop.f32.mrb[0].mxu0
  %v131 = vadd.f32 %v54, %v130
  %v132 = vpop.f32.mrb[0].mxu0
  %133 = vdwg.mxu0
  %v134 = vmax.f32 %v131, 0.0
  %v135 = vld [vmem:[%s3] sm:$0xff]
  %v136 = vld [vmem:[%s3 + $0x8] sm:$0xff]
  %v137 = vld [vmem:[%s3 + $0x10] sm:$0xff]
  %v138 = vld [vmem:[%s3 + $0x18] sm:$0xff]
  %v139 = vld [vmem:[%s3 + $0x20] sm:$0xff]
  %v140 = vld [vmem:[%s3 + $0x28] sm:$0xff]
  %v141 = vld [vmem:[%s3 + $0x30] sm:$0xff]
  %v142 = vld [vmem:[%s3 + $0x38] sm:$0xff]
  %v143 = vld [vmem:[%s4] sm:$0x1]
  %v145 = vlaneseq
  %v146 = vshrl.u32 %v145, 7
  %v147 = vsub.s32 0, %v146
  %v148 = vrot.slane %v143, %v147
  %vm150 = vcmask 523264
  %v152 = vsel %vm150, %v134, 0
  %154 = vmatprep.subr.mxu0 0.0
  %155 = vmatpush1.msra.mxu0 %v135
  %156 = vmatprep.subr.mxu0 0.0
  %157 = vmatpush1.msra.mxu0 %v136
  %158 = vmatprep.subr.mxu0 0.0
  %159 = vmatpush1.msra.mxu0 %v137
  %160 = vmatprep.subr.mxu0 0.0
  %161 = vmatpush1.msra.mxu0 %v138
  %162 = vmatprep.subr.mxu0 0.0
  %163 = vmatpush1.msra.mxu0 %v139
  %164 = vmatprep.subr.mxu0 0.0
  %165 = vmatpush1.msra.mxu0 %v140
  %166 = vmatprep.subr.mxu0 0.0
  %167 = vmatpush1.msra.mxu0 %v141
  %168 = vmatprep.subr.mxu0 0.0
  %169 = vmatpush1.msra.mxu0 %v142
  %170 = vmatprep.subr.mxu0 0.0
  %171 = vmatpush1.msra.mxu0 0.0
  %172 = vmatprep.subr.mxu0 0.0
  %173 = vmatpush1.msra.mxu0 0.0
  %174 = vmatprep.subr.mxu0 0.0
  %175 = vmatpush1.msra.mxu0 0.0
  %176 = vmatprep.subr.mxu0 0.0
  %177 = vmatpush1.msra.mxu0 0.0
  %178 = vmatprep.subr.mxu0 0.0
  %179 = vmatpush1.msra.mxu0 0.0
  %180 = vmatprep.subr.mxu0 0.0
  %181 = vmatpush1.msra.mxu0 0.0
  %182 = vmatprep.subr.mxu0 0.0
  %183 = vmatpush1.msra.mxu0 0.0
  %184 = vmatprep.subr.mxu0 0.0
  %185 = vmatpush1.msra.mxu0 0.0
  %186 = vmatprep.subr.mxu0 0.0
  %187 = vmatpush1.msra.mxu0 0.0
  %188 = vmatprep.subr.mxu0 0.0
  %189 = vmatpush1.msra.mxu0 0.0
  %190 = vmatprep.subr.mxu0 0.0
  %191 = vmatpush1.msra.mxu0 0.0
  %192 = vmatprep.subr.mxu0 0.0
  %193 = vmatpush1.msra.mxu0 0.0
  %194 = vmatprep.subr.mxu0 0.0
  %195 = vmatpush1.msra.mxu0 0.0
  %196 = vmatprep.subr.mxu0 0.0
  %197 = vmatpush1.msra.mxu0 0.0
  %198 = vmatprep.subr.mxu0 0.0
  %199 = vmatpush1.msra.mxu0 0.0
  %200 = vmatprep.subr.mxu0 0.0
  %201 = vmatpush1.msra.mxu0 0.0
  %202 = vmatprep.subr.mxu0 0.0
  %203 = vmatpush1.msra.mxu0 0.0
  %204 = vmatprep.subr.mxu0 0.0
  %205 = vmatpush1.msra.mxu0 0.0
  %206 = vmatprep.subr.mxu0 0.0
  %207 = vmatpush1.msra.mxu0 0.0
  %208 = vmatprep.subr.mxu0 0.0
  %209 = vmatpush1.msra.mxu0 0.0
  %210 = vmatprep.subr.mxu0 0.0
  %211 = vmatpush1.msra.mxu0 0.0
  %212 = vmatprep.subr.mxu0 0.0
  %213 = vmatpush1.msra.mxu0 0.0
  %214 = vmatprep.subr.mxu0 0.0
  %215 = vmatpush1.msra.mxu0 0.0
  %216 = vmatprep.subr.mxu0 0.0
  %217 = vmatpush1.msra.mxu0 0.0
  %218 = vmatprep.mubr.f32.mxu0 0.0
  %219 = vmatmul.mubr.f32.gmra.mrb[0].mxu0 %v152
  %v220 = vpop.f32.mrb[0].mxu0
  %v221 = vadd.f32 %v148, %v220
  %v222 = vpop.f32.mrb[0].mxu0
  %223 = vdwg.mxu0
  %v224 = vmax.f32 %v221, 0.0
  %v225 = vld [vmem:[%s5] sm:$0xff]
  %v226 = vld [vmem:[%s5 + $0x8] sm:$0xff]
  %v227 = vld [vmem:[%s5 + $0x10] sm:$0xff]
  %v228 = vld [vmem:[%s5 + $0x18] sm:$0xff]
  %v229 = vld [vmem:[%s6] sm:$0x1]
  %v231 = vlaneseq
  %v232 = vshrl.u32 %v231, 7
  %v233 = vsub.s32 0, %v232
  %v234 = vrot.slane %v229, %v233
  %vm236 = vcmask 261120
  %v238 = vsel %vm236, %v224, 0
  %240 = vmatprep.subr.mxu0 0.0
  %241 = vmatpush1.msra.mxu0 %v225
  %242 = vmatprep.subr.mxu0 0.0
  %243 = vmatpush1.msra.mxu0 %v226
  %244 = vmatprep.subr.mxu0 0.0
  %245 = vmatpush1.msra.mxu0 %v227
  %246 = vmatprep.subr.mxu0 0.0
  %247 = vmatpush1.msra.mxu0 %v228
  %248 = vmatprep.subr.mxu0 0.0
  %249 = vmatpush1.msra.mxu0 0.0
  %250 = vmatprep.subr.mxu0 0.0
  %251 = vmatpush1.msra.mxu0 0.0
  %252 = vmatprep.subr.mxu0 0.0
  %253 = vmatpush1.msra.mxu0 0.0
  %254 = vmatprep.subr.mxu0 0.0
  %255 = vmatpush1.msra.mxu0 0.0
  %256 = vmatprep.subr.mxu0 0.0
  %257 = vmatpush1.msra.mxu0 0.0
  %258 = vmatprep.subr.mxu0 0.0
  %259 = vmatpush1.msra.mxu0 0.0
  %260 = vmatprep.subr.mxu0 0.0
  %261 = vmatpush1.msra.mxu0 0.0
  %262 = vmatprep.subr.mxu0 0.0
  %263 = vmatpush1.msra.mxu0 0.0
  %264 = vmatprep.subr.mxu0 0.0
  %265 = vmatpush1.msra.mxu0 0.0
  %266 = vmatprep.subr.mxu0 0.0
  %267 = vmatpush1.msra.mxu0 0.0
  %268 = vmatprep.subr.mxu0 0.0
  %269 = vmatpush1.msra.mxu0 0.0
  %270 = vmatprep.subr.mxu0 0.0
  %271 = vmatpush1.msra.mxu0 0.0
  %272 = vmatprep.subr.mxu0 0.0
  %273 = vmatpush1.msra.mxu0 0.0
  %274 = vmatprep.subr.mxu0 0.0
  %275 = vmatpush1.msra.mxu0 0.0
  %276 = vmatprep.subr.mxu0 0.0
  %277 = vmatpush1.msra.mxu0 0.0
  %278 = vmatprep.subr.mxu0 0.0
  %279 = vmatpush1.msra.mxu0 0.0
  %280 = vmatprep.subr.mxu0 0.0
  %281 = vmatpush1.msra.mxu0 0.0
  %282 = vmatprep.subr.mxu0 0.0
  %283 = vmatpush1.msra.mxu0 0.0
  %284 = vmatprep.subr.mxu0 0.0
  %285 = vmatpush1.msra.mxu0 0.0
  %286 = vmatprep.subr.mxu0 0.0
  %287 = vmatpush1.msra.mxu0 0.0
  %288 = vmatprep.subr.mxu0 0.0
  %289 = vmatpush1.msra.mxu0 0.0
  %290 = vmatprep.subr.mxu0 0.0
  %291 = vmatpush1.msra.mxu0 0.0
  %292 = vmatprep.subr.mxu0 0.0
  %293 = vmatpush1.msra.mxu0 0.0
  %294 = vmatprep.subr.mxu0 0.0
  %295 = vmatpush1.msra.mxu0 0.0
  %296 = vmatprep.subr.mxu0 0.0
  %297 = vmatpush1.msra.mxu0 0.0
  %298 = vmatprep.subr.mxu0 0.0
  %299 = vmatpush1.msra.mxu0 0.0
  %300 = vmatprep.subr.mxu0 0.0
  %301 = vmatpush1.msra.mxu0 0.0
  %302 = vmatprep.subr.mxu0 0.0
  %303 = vmatpush1.msra.mxu0 0.0
  %304 = vmatprep.mubr.f32.mxu0 0.0
  %305 = vmatmul.mubr.f32.gmra.mrb[0].mxu0 %v238
  %v306 = vpop.f32.mrb[0].mxu0
  %v307 = vadd.f32 %v234, %v306
  %v308 = vpop.f32.mrb[0].mxu0
  %309 = vdwg.mxu0
  %v310 = vsub.f32 0.0, %v307
  %v311 = vmul.f32 %v310, 1.442695
  %v312 = vpow.pop %v311
  %v313 = vadd.f32 %v312, 1.0
  %v314 = vrcp.pop %v313
  %v315 = vmul.f32 1.0, %v314
  %vm316 = vcmask 31744
  %317 = vst.msk [vmem:[%s7] sm:$0xff] %vm316, %v315
  // Predicated region
  $region30: #{mask_predictor_forward.1} parent=0 // pred_check
    _
  $region31: #{mask_predictor_forward.1} parent=0 // pred_check_branch
    %319 = sbr.rel (0) target = $region33
  $region32: #{mask_predictor_forward.1} parent=0 // pred_region
    _
  $region33: #{mask_predictor_forward.1} parent=0 // pred_fallthru
    _
  // Predicated region
  $region34: #{mask_predictor_forward.1} parent=0 // pred_check
    _
  $region35: #{mask_predictor_forward.1} parent=0 // pred_check_branch
    %321 = sbr.rel (0) target = $region37
  $region36: #{mask_predictor_forward.1} parent=0 // pred_region
    _
  $region37: #{mask_predictor_forward.1} parent=0 // pred_fallthru
    _

</llo_original>
